<compile_context>
chip_gen: v7x
topology: tpu7x:2x2x1
jax: 0.10.0
libtpu: 0.0.40
codegen_flags: <defaults>
</compile_context>

<pallas_src>
import functools

import jax
import jax.numpy as jnp
import numpy as np
from jax.experimental import pallas as pl
from jax.experimental.pallas import tpu as pltpu


def _round_up(x, m):
    return ((x + m - 1) // m) * m


def ncf_kernel(mlp_u_ref, mlp_i_ref, gmf_u_ref, gmf_i_ref,
               w1u_ref, w1i_ref, b1_ref, w2_ref, b2_ref,
               wp_gmf_ref, wp_mlp_ref, out_ref):
    # --- GMF branch: elementwise product (f32 VPU regardless of storage dtype) ---
    gmf_feat = (gmf_u_ref[...].astype(jnp.float32)
                * gmf_i_ref[...].astype(jnp.float32))            # (tb, Dg)

    # --- MLP branch: first layer as two matmuls (split w1 => no lane concat) ---
    h1 = (jnp.dot(mlp_u_ref[...], w1u_ref[...], preferred_element_type=jnp.float32)
          + jnp.dot(mlp_i_ref[...], w1i_ref[...], preferred_element_type=jnp.float32)
          + b1_ref[...].astype(jnp.float32))                     # (tb, H1)
    h1 = jnp.maximum(h1, 0.0)
    h2 = (jnp.dot(h1, w2_ref[...], preferred_element_type=jnp.float32)
          + b2_ref[...].astype(jnp.float32))                     # (tb, H2)
    h2 = jnp.maximum(h2, 0.0)

    # --- Fused (halved) NCF projector, split into two lane-dense (1, tb) dots:
    #     cat([gmf, h2], 1) @ [wp_gmf/2 | wp_mlp/2].T
    #   = wp_gmf/2 . gmf^T + wp_mlp/2 . h2^T   (two MXU pushes + one VPU add,
    #     no in-kernel concat, output already lane-major -> unmasked store).
    s_gmf = jax.lax.dot_general(
        wp_gmf_ref[...].astype(jnp.float32), gmf_feat,
        dimension_numbers=(((1,), (1,)), ((), ())),
        preferred_element_type=jnp.float32)                      # (1, tb)
    s_mlp = jax.lax.dot_general(
        wp_mlp_ref[...].astype(jnp.float32), h2,
        dimension_numbers=(((1,), (1,)), ((), ())),
        preferred_element_type=jnp.float32)                      # (1, tb)
    out_ref[...] = s_gmf + s_mlp


def _pick_tile(B, dm, dg, h1, h2, tb):
    """Batch tile: multiple of 128, big enough to amortize per-step overhead,
    capped so per-step VMEM fits v5e's 16 MiB scoped default, and sized so
    large batches give >= ~8 grid steps (megacore sharding on v7x)."""
    if tb is None:
        tb = _round_up(pl.cdiv(B, 8), 128)
        tb = max(512, min(4096, tb))
        tb = min(tb, _round_up(B, 128))       # never larger than one (padded) batch
    tb = max(128, _round_up(int(tb), 128))
    # Conservative VMEM cap: 2x double-buffered gathered rows + f32 activations.
    row_bytes = 4 * (2 * dm + 2 * dg + h1 + h2 + 2)
    max_tb = max(128, ((12 << 20) // (2 * row_bytes)) // 128 * 128)
    return min(tb, max_tb)


def ncf_forward(users, items, params, *, tb=None):
    """NCF.forward(users, items) -> score of shape (B,)."""
    # Embedding gather stays in XLA (see TODO above); everything downstream of
    # the gather is fused into one Pallas kernel with no extra HBM passes.
    gmf_u = params["gmf_user_emb"][users]           # (B, Dg)
    gmf_i = params["gmf_item_emb"][items]           # (B, Dg)
    mlp_u = params["mlp_user_emb"][users]           # (B, Dm)
    mlp_i = params["mlp_item_emb"][items]           # (B, Dm)

    B, Dg = gmf_u.shape
    Dm = mlp_u.shape[1]
    w1, b1 = params["mlp_w1"], params["mlp_b1"]     # (2Dm, H1), (1, H1)
    w2, b2 = params["mlp_w2"], params["mlp_b2"]     # (H1, H2), (1, H2)
    H1, H2 = w1.shape[1], w2.shape[1]

    # Split w1 so the kernel never concatenates [mlp_u | mlp_i] along lanes.
    w1u, w1i = w1[:Dm], w1[Dm:]                     # (Dm, H1) each
    # Projector halves (already / 2, as in NCF._get_projector), as (1, D) rows.
    wp_gmf = params["proj_w_gmf"].T                 # (1, Dg)
    wp_mlp = params["proj_w_mlp"].T                 # (1, H2)

    tb = _pick_tile(B, Dm, Dg, H1, H2, tb)
    num_tiles = pl.cdiv(B, tb)
    B_pad = num_tiles * tb                          # output-only padding (no input copy)

    batch_spec = lambda d: pl.BlockSpec((tb, d), lambda i: (i, 0))
    full2d = lambda shape: pl.BlockSpec(shape, lambda i: (0, 0))

    scores = pl.pallas_call(
        ncf_kernel,
        out_shape=jax.ShapeDtypeStruct((1, B_pad), jnp.float32),
        grid=(num_tiles,),
        in_specs=[
            batch_spec(Dm),                         # mlp_user rows (batch-tiled)
            batch_spec(Dm),                         # mlp_item rows
            batch_spec(Dg),                         # gmf_user rows
            batch_spec(Dg),                         # gmf_item rows
            full2d((Dm, H1)),                       # w1 (user half, resident)
            full2d((Dm, H1)),                       # w1 (item half, resident)
            full2d((1, H1)),                        # b1
            full2d((H1, H2)),                       # w2
            full2d((1, H2)),                        # b2
            full2d((1, Dg)),                        # gmf projector row (/2)
            full2d((1, H2)),                        # mlp projector row (/2)
        ],
        out_specs=pl.BlockSpec((1, tb), lambda i: (0, i)),   # lane-dense score row
        compiler_params=pltpu.CompilerParams(
            dimension_semantics=("parallel",)),
    )(mlp_u, mlp_i, gmf_u, gmf_i, w1u, w1i, b1, w2, b2, wp_gmf, wp_mlp)

    return scores[0, :B]                            # .squeeze(dim=1)


def make_params(key, *, n_users, n_items, dg, dm, h1, h2, dtype=jnp.float32):
    # Note: dtype=jnp.bfloat16 for the tables/weights halves HBM traffic on
    # v6e/v7x; the kernel accumulates in f32 either way.
    ks = jax.random.split(key, 10)
    scale = 0.1
    gmf_user_emb = (scale * jax.random.normal(ks[0], (n_users, dg))).astype(dtype)
    gmf_item_emb = (scale * jax.random.normal(ks[1], (n_items, dg))).astype(dtype)
    mlp_user_emb = (scale * jax.random.normal(ks[2], (n_users, dm))).astype(dtype)
    mlp_item_emb = (scale * jax.random.normal(ks[3], (n_items, dm))).astype(dtype)
    mlp_w1 = (scale * jax.random.normal(ks[4], (2 * dm, h1))).astype(dtype)
    mlp_b1 = (scale * jax.random.normal(ks[5], (1, h1))).astype(dtype)
    mlp_w2 = (scale * jax.random.normal(ks[6], (h1, h2))).astype(dtype)
    mlp_b2 = (scale * jax.random.normal(ks[7], (1, h2))).astype(dtype)
    # sub-module projector weights (nn.Linear(*, 1, bias=False) -> weight shape (1, D))
    gmf_proj_w = (scale * jax.random.normal(ks[8], (1, dg))).astype(dtype)
    mlp_proj_w = (scale * jax.random.normal(ks[9], (1, h2))).astype(dtype)
    # NCF._get_projector: weight = cat([gmf_w/2, mlp_w/2], dim=1); store transposed halves.
    proj_w_gmf = (gmf_proj_w / 2.0).T            # (Dg, 1)
    proj_w_mlp = (mlp_proj_w / 2.0).T            # (H2, 1)
    return dict(gmf_user_emb=gmf_user_emb, gmf_item_emb=gmf_item_emb,
                mlp_user_emb=mlp_user_emb, mlp_item_emb=mlp_item_emb,
                mlp_w1=mlp_w1, mlp_b1=mlp_b1, mlp_w2=mlp_w2, mlp_b2=mlp_b2,
                proj_w_gmf=proj_w_gmf, proj_w_mlp=proj_w_mlp)


def ncf_reference(users, items, params):
    gmf_feat = params["gmf_user_emb"][users] * params["gmf_item_emb"][items]
    x = jnp.concatenate([params["mlp_user_emb"][users],
                         params["mlp_item_emb"][items]], axis=1)
    h1 = jnp.maximum(x @ params["mlp_w1"] + params["mlp_b1"], 0.0)
    h2 = jnp.maximum(h1 @ params["mlp_w2"] + params["mlp_b2"], 0.0)
    score = gmf_feat @ params["proj_w_gmf"] + h2 @ params["proj_w_mlp"]
    return jnp.squeeze(score, axis=1)


if __name__ == "__main__":
    key = jax.random.PRNGKey(0)
    kp, ku, ki = jax.random.split(key, 3)

    n_users, n_items = 50, 40
    Dg, Dm, H1, H2 = 16, 16, 32, 16
    B = 8

    params = make_params(kp, n_users=n_users, n_items=n_items,
                         dg=Dg, dm=Dm, h1=H1, h2=H2)
    users = jax.random.randint(ku, (B,), 0, n_users, dtype=jnp.int32)
    items = jax.random.randint(ki, (B,), 0, n_items, dtype=jnp.int32)

    score = ncf_forward(users, items, params)
    jax.block_until_ready(score)

    ref = ncf_reference(users, items, params)
    np.testing.assert_allclose(np.asarray(score), np.asarray(ref),
                               rtol=1e-5, atol=1e-5)
    assert score.shape == (B,)
    print("KERNEL_OK")
</pallas_src>

<mosaic_0001>
module attributes {stable_mosaic.version = 11 : i64} {
  func.func @ncf_kernel(%arg0: i32, %arg1: memref<128x16xf32, #tpu.memory_space<vmem>>, %arg2: memref<128x16xf32, #tpu.memory_space<vmem>>, %arg3: memref<128x16xf32, #tpu.memory_space<vmem>>, %arg4: memref<128x16xf32, #tpu.memory_space<vmem>>, %arg5: memref<16x32xf32, #tpu.memory_space<vmem>>, %arg6: memref<16x32xf32, #tpu.memory_space<vmem>>, %arg7: memref<1x32xf32, #tpu.memory_space<vmem>>, %arg8: memref<32x16xf32, #tpu.memory_space<vmem>>, %arg9: memref<1x16xf32, #tpu.memory_space<vmem>>, %arg10: memref<1x16xf32, #tpu.memory_space<vmem>>, %arg11: memref<1x16xf32, #tpu.memory_space<vmem>>, %arg12: memref<1x128xf32, #tpu.memory_space<vmem>>) attributes {dimension_semantics = [#tpu.dimension_semantics<parallel>], iteration_bounds = array<i64: 1>, scalar_prefetch = 0 : i64, scratch_operands = 0 : i64, tpu.core_type = #tpu.core_type<tc>, window_params = [{transform_indices = @transform_0, window_bounds = array<i64: 128, 16>}, {transform_indices = @transform_1, window_bounds = array<i64: 128, 16>}, {transform_indices = @transform_2, window_bounds = array<i64: 128, 16>}, {transform_indices = @transform_3, window_bounds = array<i64: 128, 16>}, {pipeline_mode = #tpu.pipeline_mode<synchronous>, transform_indices = @transform_4, window_bounds = array<i64: 16, 32>}, {pipeline_mode = #tpu.pipeline_mode<synchronous>, transform_indices = @transform_5, window_bounds = array<i64: 16, 32>}, {pipeline_mode = #tpu.pipeline_mode<synchronous>, transform_indices = @transform_6, window_bounds = array<i64: 1, 32>}, {pipeline_mode = #tpu.pipeline_mode<synchronous>, transform_indices = @transform_7, window_bounds = array<i64: 32, 16>}, {pipeline_mode = #tpu.pipeline_mode<synchronous>, transform_indices = @transform_8, window_bounds = array<i64: 1, 16>}, {pipeline_mode = #tpu.pipeline_mode<synchronous>, transform_indices = @transform_9, window_bounds = array<i64: 1, 16>}, {pipeline_mode = #tpu.pipeline_mode<synchronous>, transform_indices = @transform_10, window_bounds = array<i64: 1, 16>}, {transform_indices = @transform_11, window_bounds = array<i64: 1, 128>}]} {
    %c0 = arith.constant 0 : index
    %c0_0 = arith.constant 0 : index
    %0 = vector.load %arg3[%c0, %c0_0] : memref<128x16xf32, #tpu.memory_space<vmem>>, vector<128x16xf32>
    %c0_1 = arith.constant 0 : index
    %c0_2 = arith.constant 0 : index
    %1 = vector.load %arg4[%c0_1, %c0_2] : memref<128x16xf32, #tpu.memory_space<vmem>>, vector<128x16xf32>
    %2 = arith.mulf %0, %1 : vector<128x16xf32>
    %c0_3 = arith.constant 0 : index
    %c0_4 = arith.constant 0 : index
    %3 = vector.load %arg1[%c0_3, %c0_4] : memref<128x16xf32, #tpu.memory_space<vmem>>, vector<128x16xf32>
    %c0_5 = arith.constant 0 : index
    %c0_6 = arith.constant 0 : index
    %4 = vector.load %arg5[%c0_5, %c0_6] : memref<16x32xf32, #tpu.memory_space<vmem>>, vector<16x32xf32>
    %cst = arith.constant dense<0.000000e+00> : vector<128x32xf32>
    %5 = tpu.matmul %3, %4, %cst {dimension_numbers = #tpu.dot_dimension_numbers<[1], [0], [0], [1], [0, 0, 1, 1], [], []>} : vector<128x16xf32>, vector<16x32xf32>, vector<128x32xf32> -> vector<128x32xf32>
    %c0_7 = arith.constant 0 : index
    %c0_8 = arith.constant 0 : index
    %6 = vector.load %arg2[%c0_7, %c0_8] : memref<128x16xf32, #tpu.memory_space<vmem>>, vector<128x16xf32>
    %c0_9 = arith.constant 0 : index
    %c0_10 = arith.constant 0 : index
    %7 = vector.load %arg6[%c0_9, %c0_10] : memref<16x32xf32, #tpu.memory_space<vmem>>, vector<16x32xf32>
    %cst_11 = arith.constant dense<0.000000e+00> : vector<128x32xf32>
    %8 = tpu.matmul %6, %7, %cst_11 {dimension_numbers = #tpu.dot_dimension_numbers<[1], [0], [0], [1], [0, 0, 1, 1], [], []>} : vector<128x16xf32>, vector<16x32xf32>, vector<128x32xf32> -> vector<128x32xf32>
    %9 = arith.addf %5, %8 : vector<128x32xf32>
    %c0_12 = arith.constant 0 : index
    %c0_13 = arith.constant 0 : index
    %10 = vector.load %arg7[%c0_12, %c0_13] : memref<1x32xf32, #tpu.memory_space<vmem>>, vector<1x32xf32>
    %11 = vector.broadcast %10 : vector<1x32xf32> to vector<128x32xf32>
    %12 = arith.addf %9, %11 : vector<128x32xf32>
    %cst_14 = arith.constant 0.000000e+00 : f32
    %13 = vector.broadcast %cst_14 : f32 to vector<128x32xf32>
    %14 = arith.maximumf %12, %13 : vector<128x32xf32>
    %c0_15 = arith.constant 0 : index
    %c0_16 = arith.constant 0 : index
    %15 = vector.load %arg8[%c0_15, %c0_16] : memref<32x16xf32, #tpu.memory_space<vmem>>, vector<32x16xf32>
    %cst_17 = arith.constant dense<0.000000e+00> : vector<128x16xf32>
    %16 = tpu.matmul %14, %15, %cst_17 {dimension_numbers = #tpu.dot_dimension_numbers<[1], [0], [0], [1], [0, 0, 1, 1], [], []>} : vector<128x32xf32>, vector<32x16xf32>, vector<128x16xf32> -> vector<128x16xf32>
    %c0_18 = arith.constant 0 : index
    %c0_19 = arith.constant 0 : index
    %17 = vector.load %arg9[%c0_18, %c0_19] : memref<1x16xf32, #tpu.memory_space<vmem>>, vector<1x16xf32>
    %18 = vector.broadcast %17 : vector<1x16xf32> to vector<128x16xf32>
    %19 = arith.addf %16, %18 : vector<128x16xf32>
    %cst_20 = arith.constant 0.000000e+00 : f32
    %20 = vector.broadcast %cst_20 : f32 to vector<128x16xf32>
    %21 = arith.maximumf %19, %20 : vector<128x16xf32>
    %c0_21 = arith.constant 0 : index
    %c0_22 = arith.constant 0 : index
    %22 = vector.load %arg10[%c0_21, %c0_22] : memref<1x16xf32, #tpu.memory_space<vmem>>, vector<1x16xf32>
    %cst_23 = arith.constant dense<0.000000e+00> : vector<1x128xf32>
    %23 = tpu.matmul %22, %2, %cst_23 {dimension_numbers = #tpu.dot_dimension_numbers<[1], [1], [0], [0], [0, 0, 1, 0], [], []>} : vector<1x16xf32>, vector<128x16xf32>, vector<1x128xf32> -> vector<1x128xf32>
    %c0_24 = arith.constant 0 : index
    %c0_25 = arith.constant 0 : index
    %24 = vector.load %arg11[%c0_24, %c0_25] : memref<1x16xf32, #tpu.memory_space<vmem>>, vector<1x16xf32>
    %cst_26 = arith.constant dense<0.000000e+00> : vector<1x128xf32>
    %25 = tpu.matmul %24, %21, %cst_26 {dimension_numbers = #tpu.dot_dimension_numbers<[1], [1], [0], [0], [0, 0, 1, 0], [], []>} : vector<1x16xf32>, vector<128x16xf32>, vector<1x128xf32> -> vector<1x128xf32>
    %26 = arith.addf %23, %25 : vector<1x128xf32>
    %c0_27 = arith.constant 0 : index
    %c0_28 = arith.constant 0 : index
    %27 = vector.load %arg12[%c0_27, %c0_28] : memref<1x128xf32, #tpu.memory_space<vmem>>, vector<1x128xf32>
    tpu.vector_store %arg12[%c0_27, %c0_28], %26 {strides = array<i32>} : memref<1x128xf32, #tpu.memory_space<vmem>>, vector<1x128xf32>,
    return
  }
  func.func @transform_0(%arg0: i32) -> (i32, i32) {
    %c0_i32 = arith.constant 0 : i32
    %c0_i32_0 = arith.constant 0 : i32
    return %arg0, %c0_i32 : i32, i32
  }
  func.func @transform_1(%arg0: i32) -> (i32, i32) {
    %c0_i32 = arith.constant 0 : i32
    %c0_i32_0 = arith.constant 0 : i32
    return %arg0, %c0_i32 : i32, i32
  }
  func.func @transform_2(%arg0: i32) -> (i32, i32) {
    %c0_i32 = arith.constant 0 : i32
    %c0_i32_0 = arith.constant 0 : i32
    return %arg0, %c0_i32 : i32, i32
  }
  func.func @transform_3(%arg0: i32) -> (i32, i32) {
    %c0_i32 = arith.constant 0 : i32
    %c0_i32_0 = arith.constant 0 : i32
    return %arg0, %c0_i32 : i32, i32
  }
  func.func @transform_4(%arg0: i32) -> (i32, i32) {
    %c0_i32 = arith.constant 0 : i32
    %c0_i32_0 = arith.constant 0 : i32
    %c0_i32_1 = arith.constant 0 : i32
    return %c0_i32, %c0_i32_0 : i32, i32
  }
  func.func @transform_5(%arg0: i32) -> (i32, i32) {
    %c0_i32 = arith.constant 0 : i32
    %c0_i32_0 = arith.constant 0 : i32
    %c0_i32_1 = arith.constant 0 : i32
    return %c0_i32, %c0_i32_0 : i32, i32
  }
  func.func @transform_6(%arg0: i32) -> (i32, i32) {
    %c0_i32 = arith.constant 0 : i32
    %c0_i32_0 = arith.constant 0 : i32
    %c0_i32_1 = arith.constant 0 : i32
    return %c0_i32, %c0_i32_0 : i32, i32
  }
  func.func @transform_7(%arg0: i32) -> (i32, i32) {
    %c0_i32 = arith.constant 0 : i32
    %c0_i32_0 = arith.constant 0 : i32
    %c0_i32_1 = arith.constant 0 : i32
    return %c0_i32, %c0_i32_0 : i32, i32
  }
  func.func @transform_8(%arg0: i32) -> (i32, i32) {
    %c0_i32 = arith.constant 0 : i32
    %c0_i32_0 = arith.constant 0 : i32
    %c0_i32_1 = arith.constant 0 : i32
    return %c0_i32, %c0_i32_0 : i32, i32
  }
  func.func @transform_9(%arg0: i32) -> (i32, i32) {
    %c0_i32 = arith.constant 0 : i32
    %c0_i32_0 = arith.constant 0 : i32
    %c0_i32_1 = arith.constant 0 : i32
    return %c0_i32, %c0_i32_0 : i32, i32
  }
  func.func @transform_10(%arg0: i32) -> (i32, i32) {
    %c0_i32 = arith.constant 0 : i32
    %c0_i32_0 = arith.constant 0 : i32
    %c0_i32_1 = arith.constant 0 : i32
    return %c0_i32, %c0_i32_0 : i32, i32
  }
  func.func @transform_11(%arg0: i32) -> (i32, i32) {
    %c0_i32 = arith.constant 0 : i32
    %c0_i32_0 = arith.constant 0 : i32
    return %c0_i32, %arg0 : i32, i32
  }
}

</mosaic_0001>

<llo_original>
// kernel: tpu_custom_call.1
$region0: #{tpu_custom_call.1}
  #allocation0 [shape = 'u32[]', space=smem, size = 0x4, offset = 0x4, fixed_abs, tag = 'smem constant byte address 0x4 - core index']
  #allocation1 [shape = 'u32[144,128]{1,0:T(1,128)}', space=vmem, size = 0x12000, scoped, tag = 'internal scratch']
  %s0 = inlined_call_operand.vmem [shape: f32[8,16], index: 0, kind: input, shape index: {}]
  %s1 = inlined_call_operand.vmem [shape: f32[8,16], index: 1, kind: input, shape index: {}]
  %s2 = inlined_call_operand.hbm [shape: f32[8,16], index: 2, kind: input, shape index: {}]
  %s3 = inlined_call_operand.vmem [shape: f32[8,16], index: 3, kind: input, shape index: {}]
  %s4 = inlined_call_operand.vmem [shape: f32[16,32], index: 4, kind: input, shape index: {}]
  %s5 = inlined_call_operand.vmem [shape: f32[16,32], index: 5, kind: input, shape index: {}]
  %s6 = inlined_call_operand.vmem [shape: f32[1,32], index: 6, kind: input, shape index: {}]
  %s7 = inlined_call_operand.vmem [shape: f32[32,16], index: 7, kind: input, shape index: {}]
  %s8 = inlined_call_operand.vmem [shape: f32[1,16], index: 8, kind: input, shape index: {}]
  %s9 = inlined_call_operand.vmem [shape: f32[1,16], index: 9, kind: input, shape index: {}]
  %s10 = inlined_call_operand.vmem [shape: f32[1,16], index: 10, kind: input, shape index: {}]
  %s11 = inlined_call_operand.hbm [shape: f32[1,128], index: 11, kind: output, shape index: {}]
  %s12 = sld [smem:[#allocation0]]
  $region58: #{tpu_custom_call.1} parent=0
    _
  %s14 = ssub.s32 1, %s12
  %s15 = scalar_select 0, %s14, %s12
  $region1: #{tpu_custom_call.1} parent=0
    #allocation2 [shape = 'u8[65536]{0}', space=vmem, size = 0x10000, scoped, tag = 'input window, operand 2, single buffered']
    #allocation3 [shape = 's32[1]{0}', space=sflag, size = 0x4, scoped, tag = 'scoped memory for tpu_custom_call.1']
    #allocation4 [shape = 's32[1]{0}', space=sflag, size = 0x4, scoped, tag = 'scoped memory for tpu_custom_call.1']
    #allocation5 [shape = 'u8[512]{0}', space=vmem, size = 0x400, scoped, tag = 'output window, operand 0, single buffered']
    %16 = vsyncpa [#allocation3], 0
    %17 = vsyncpa [#allocation4], 0
    // Predicated region
    $region2: #{tpu_custom_call.1} parent=1 // pred_check
      _
    $region3: #{tpu_custom_call.1} parent=1 // pred_check_branch
      %19 = sbr.rel (0) target = $region5
    $region4: #{tpu_custom_call.1} parent=1 // pred_region
      _
    $region5: #{tpu_custom_call.1} parent=1 // pred_fallthru
      _
    // Predicated region
    $region6: #{tpu_custom_call.1} parent=1 // pred_check
      _
    $region7: #{tpu_custom_call.1} parent=1 // pred_check_branch
      %21 = sbr.rel (0) target = $region9
    $region8: #{tpu_custom_call.1} parent=1 // pred_region
      _
    $region9: #{tpu_custom_call.1} parent=1 // pred_fallthru
      _
    // Predicated region
    $region10: #{tpu_custom_call.1} parent=1 // pred_check
      _
    $region11: #{tpu_custom_call.1} parent=1 // pred_check_branch
      %23 = sbr.rel (0) target = $region13
    $region12: #{tpu_custom_call.1} parent=1 // pred_region
      %s25 = ssub.s32 2048, 128
      %26 = vsyncadd [#allocation3], %s25
      %s27 = sshll.u32 [#allocation2], 4
      %s28 = int_to_ptr.vmem [resolvable:$true] %s27
      %33 = dma.hbm_to_vmem [thread:$0]  %s2, 128, %s28, [#allocation3], 128, 128, 8
    $region13: #{tpu_custom_call.1} parent=1 // pred_fallthru
      _
    // Predicated region
    $region14: #{tpu_custom_call.1} parent=1 // pred_check
      _
    $region15: #{tpu_custom_call.1} parent=1 // pred_check_branch
      %35 = sbr.rel (0) target = $region17
    $region16: #{tpu_custom_call.1} parent=1 // pred_region
      _
    $region17: #{tpu_custom_call.1} parent=1 // pred_fallthru
      _
    // Predicated region
    $region18: #{tpu_custom_call.1} parent=1 // pred_check
      _
    $region19: #{tpu_custom_call.1} parent=1 // pred_check_branch
      %37 = sbr.rel (0) target = $region21
    $region20: #{tpu_custom_call.1} parent=1 // pred_region
      _
    $region21: #{tpu_custom_call.1} parent=1 // pred_fallthru
      _
    // Predicated region
    $region22: #{tpu_custom_call.1} parent=1 // pred_check
      _
    $region23: #{tpu_custom_call.1} parent=1 // pred_check_branch
      %39 = sbr.rel (0) target = $region25
    $region24: #{tpu_custom_call.1} parent=1 // pred_region
      _
    $region25: #{tpu_custom_call.1} parent=1 // pred_fallthru
      _
    // Predicated region
    $region26: #{tpu_custom_call.1} parent=1 // pred_check
      _
    $region27: #{tpu_custom_call.1} parent=1 // pred_check_branch
      %41 = sbr.rel (0) target = $region29
    $region28: #{tpu_custom_call.1} parent=1 // pred_region
      _
    $region29: #{tpu_custom_call.1} parent=1 // pred_fallthru
      _
    // Predicated region
    $region30: #{tpu_custom_call.1} parent=1 // pred_check
      _
    $region31: #{tpu_custom_call.1} parent=1 // pred_check_branch
      %43 = sbr.rel (0) target = $region33
    $region32: #{tpu_custom_call.1} parent=1 // pred_region
      _
    $region33: #{tpu_custom_call.1} parent=1 // pred_fallthru
      _
    // Predicated region
    $region34: #{tpu_custom_call.1} parent=1 // pred_check
      _
    $region35: #{tpu_custom_call.1} parent=1 // pred_check_branch
      %45 = sbr.rel (0) target = $region37
    $region36: #{tpu_custom_call.1} parent=1 // pred_region
      _
    $region37: #{tpu_custom_call.1} parent=1 // pred_fallthru
      _
    // Predicated region
    $region38: #{tpu_custom_call.1} parent=1 // pred_check
      _
    $region39: #{tpu_custom_call.1} parent=1 // pred_check_branch
      %47 = sbr.rel (0) target = $region41
    $region40: #{tpu_custom_call.1} parent=1 // pred_region
      _
    $region41: #{tpu_custom_call.1} parent=1 // pred_fallthru
      _
    // Predicated region
    $region42: #{tpu_custom_call.1} parent=1 // pred_check
      _
    $region43: #{tpu_custom_call.1} parent=1 // pred_check_branch
      %49 = sbr.rel (0) target = $region45
    $region44: #{tpu_custom_call.1} parent=1 // pred_region
      _
    $region45: #{tpu_custom_call.1} parent=1 // pred_fallthru
      _
    // Predicated region
    $region46: #{tpu_custom_call.1} parent=1 // pred_check
      _
    $region47: #{tpu_custom_call.1} parent=1 // pred_check_branch
      %51 = sbr.rel (0) target = $region49
    $region48: #{tpu_custom_call.1} parent=1 // pred_region
      %52 = dma.done [#allocation3], 2048
    $region49: #{tpu_custom_call.1} parent=1 // pred_fallthru
      _
    %v53 = vld [vmem:[#allocation2] sm:$0xff]
    %v54 = vld [vmem:[#allocation2 + $0x8] sm:$0xff]
    %v55 = vld [vmem:[#allocation2 + $0x10] sm:$0xff]
    %v56 = vld [vmem:[#allocation2 + $0x18] sm:$0xff]
    %v57 = vld [vmem:[#allocation2 + $0x20] sm:$0xff]
    %v58 = vld [vmem:[#allocation2 + $0x28] sm:$0xff]
    %v59 = vld [vmem:[#allocation2 + $0x30] sm:$0xff]
    %v60 = vld [vmem:[#allocation2 + $0x38] sm:$0xff]
    %v61 = vld [vmem:[#allocation2 + $0x40] sm:$0xff]
    %v62 = vld [vmem:[#allocation2 + $0x48] sm:$0xff]
    %v63 = vld [vmem:[#allocation2 + $0x50] sm:$0xff]
    %v64 = vld [vmem:[#allocation2 + $0x58] sm:$0xff]
    %v65 = vld [vmem:[#allocation2 + $0x60] sm:$0xff]
    %v66 = vld [vmem:[#allocation2 + $0x68] sm:$0xff]
    %v67 = vld [vmem:[#allocation2 + $0x70] sm:$0xff]
    %v68 = vld [vmem:[#allocation2 + $0x78] sm:$0xff]
    %v69 = vld [vmem:[%s3] sm:$0xff]
    %v70 = vld [vmem:[%s3 + $0x8] sm:$0xff]
    %v71 = vld [vmem:[%s3 + $0x10] sm:$0xff]
    %v72 = vld [vmem:[%s3 + $0x18] sm:$0xff]
    %v73 = vld [vmem:[%s3 + $0x20] sm:$0xff]
    %v74 = vld [vmem:[%s3 + $0x28] sm:$0xff]
    %v75 = vld [vmem:[%s3 + $0x30] sm:$0xff]
    %v76 = vld [vmem:[%s3 + $0x38] sm:$0xff]
    %v77 = vld [vmem:[%s3 + $0x40] sm:$0xff]
    %v78 = vld [vmem:[%s3 + $0x48] sm:$0xff]
    %v79 = vld [vmem:[%s3 + $0x50] sm:$0xff]
    %v80 = vld [vmem:[%s3 + $0x58] sm:$0xff]
    %v81 = vld [vmem:[%s3 + $0x60] sm:$0xff]
    %v82 = vld [vmem:[%s3 + $0x68] sm:$0xff]
    %v83 = vld [vmem:[%s3 + $0x70] sm:$0xff]
    %v84 = vld [vmem:[%s3 + $0x78] sm:$0xff]
    %v85 = vmul.f32 %v53, %v69
    %v86 = vmul.f32 %v54, %v70
    %v87 = vmul.f32 %v55, %v71
    %v88 = vmul.f32 %v56, %v72
    %v89 = vmul.f32 %v57, %v73
    %v90 = vmul.f32 %v58, %v74
    %v91 = vmul.f32 %v59, %v75
    %v92 = vmul.f32 %v60, %v76
    %v93 = vmul.f32 %v61, %v77
    %v94 = vmul.f32 %v62, %v78
    %v95 = vmul.f32 %v63, %v79
    %v96 = vmul.f32 %v64, %v80
    %v97 = vmul.f32 %v65, %v81
    %v98 = vmul.f32 %v66, %v82
    %v99 = vmul.f32 %v67, %v83
    %v100 = vmul.f32 %v68, %v84
    %v101 = vld [vmem:[%s0] sm:$0xff]
    %v102 = vld [vmem:[%s0 + $0x8] sm:$0xff]
    %v103 = vld [vmem:[%s0 + $0x10] sm:$0xff]
    %v104 = vld [vmem:[%s0 + $0x18] sm:$0xff]
    %v105 = vld [vmem:[%s0 + $0x20] sm:$0xff]
    %v106 = vld [vmem:[%s0 + $0x28] sm:$0xff]
    %v107 = vld [vmem:[%s0 + $0x30] sm:$0xff]
    %v108 = vld [vmem:[%s0 + $0x38] sm:$0xff]
    %v109 = vld [vmem:[%s0 + $0x40] sm:$0xff]
    %v110 = vld [vmem:[%s0 + $0x48] sm:$0xff]
    %v111 = vld [vmem:[%s0 + $0x50] sm:$0xff]
    %v112 = vld [vmem:[%s0 + $0x58] sm:$0xff]
    %v113 = vld [vmem:[%s0 + $0x60] sm:$0xff]
    %v114 = vld [vmem:[%s0 + $0x68] sm:$0xff]
    %v115 = vld [vmem:[%s0 + $0x70] sm:$0xff]
    %v116 = vld [vmem:[%s0 + $0x78] sm:$0xff]
    %v117 = vld [vmem:[%s4] sm:$0xff]
    %v118 = vld [vmem:[%s4 + $0x8] sm:$0xff]
    %v119 = vld [vmem:[%s1] sm:$0xff]
    %v120 = vld [vmem:[%s1 + $0x8] sm:$0xff]
    %v121 = vld [vmem:[%s1 + $0x10] sm:$0xff]
    %v122 = vld [vmem:[%s1 + $0x18] sm:$0xff]
    %v123 = vld [vmem:[%s1 + $0x20] sm:$0xff]
    %v124 = vld [vmem:[%s1 + $0x28] sm:$0xff]
    %v125 = vld [vmem:[%s1 + $0x30] sm:$0xff]
    %v126 = vld [vmem:[%s1 + $0x38] sm:$0xff]
    %v127 = vld [vmem:[%s1 + $0x40] sm:$0xff]
    %v128 = vld [vmem:[%s1 + $0x48] sm:$0xff]
    %v129 = vld [vmem:[%s1 + $0x50] sm:$0xff]
    %v130 = vld [vmem:[%s1 + $0x58] sm:$0xff]
    %v131 = vld [vmem:[%s1 + $0x60] sm:$0xff]
    %v132 = vld [vmem:[%s1 + $0x68] sm:$0xff]
    %v133 = vld [vmem:[%s1 + $0x70] sm:$0xff]
    %v134 = vld [vmem:[%s1 + $0x78] sm:$0xff]
    %v135 = vld [vmem:[%s5] sm:$0xff]
    %v136 = vld [vmem:[%s5 + $0x8] sm:$0xff]
    %vm137 = vcmask 130048
    %v139 = vsel %vm137, %v119, 0
    %v142 = vsel %vm137, %v120, 0
    %v145 = vsel %vm137, %v121, 0
    %v148 = vsel %vm137, %v122, 0
    %v151 = vsel %vm137, %v123, 0
    %v154 = vsel %vm137, %v124, 0
    %v157 = vsel %vm137, %v125, 0
    %v160 = vsel %vm137, %v126, 0
    %v163 = vsel %vm137, %v127, 0
    %v166 = vsel %vm137, %v128, 0
    %v169 = vsel %vm137, %v129, 0
    %v172 = vsel %vm137, %v130, 0
    %v175 = vsel %vm137, %v131, 0
    %v178 = vsel %vm137, %v132, 0
    %v181 = vsel %vm137, %v133, 0
    %v184 = vsel %vm137, %v134, 0
    %186 = vmatprep.subr.mxu0 0.0
    %187 = vmatpush1.msra.mxu0 %v135
    %188 = vmatprep.subr.mxu0 0.0
    %189 = vmatpush1.msra.mxu0 %v136
    %190 = vmatprep.subr.mxu0 0.0
    %191 = vmatpush1.msra.mxu0 0.0
    %192 = vmatprep.subr.mxu0 0.0
    %193 = vmatpush1.msra.mxu0 0.0
    %194 = vmatprep.subr.mxu0 0.0
    %195 = vmatpush1.msra.mxu0 0.0
    %196 = vmatprep.subr.mxu0 0.0
    %197 = vmatpush1.msra.mxu0 0.0
    %198 = vmatprep.subr.mxu0 0.0
    %199 = vmatpush1.msra.mxu0 0.0
    %200 = vmatprep.subr.mxu0 0.0
    %201 = vmatpush1.msra.mxu0 0.0
    %202 = vmatprep.subr.mxu0 0.0
    %203 = vmatpush1.msra.mxu0 0.0
    %204 = vmatprep.subr.mxu0 0.0
    %205 = vmatpush1.msra.mxu0 0.0
    %206 = vmatprep.subr.mxu0 0.0
    %207 = vmatpush1.msra.mxu0 0.0
    %208 = vmatprep.subr.mxu0 0.0
    %209 = vmatpush1.msra.mxu0 0.0
    %210 = vmatprep.subr.mxu0 0.0
    %211 = vmatpush1.msra.mxu0 0.0
    %212 = vmatprep.subr.mxu0 0.0
    %213 = vmatpush1.msra.mxu0 0.0
    %214 = vmatprep.subr.mxu0 0.0
    %215 = vmatpush1.msra.mxu0 0.0
    %216 = vmatprep.subr.mxu0 0.0
    %217 = vmatpush1.msra.mxu0 0.0
    %218 = vmatprep.subr.mxu0 0.0
    %219 = vmatpush1.msra.mxu0 0.0
    %220 = vmatprep.subr.mxu0 0.0
    %221 = vmatpush1.msra.mxu0 0.0
    %222 = vmatprep.subr.mxu0 0.0
    %223 = vmatpush1.msra.mxu0 0.0
    %224 = vmatprep.subr.mxu0 0.0
    %225 = vmatpush1.msra.mxu0 0.0
    %226 = vmatprep.subr.mxu0 0.0
    %227 = vmatpush1.msra.mxu0 0.0
    %228 = vmatprep.subr.mxu0 0.0
    %229 = vmatpush1.msra.mxu0 0.0
    %230 = vmatprep.subr.mxu0 0.0
    %231 = vmatpush1.msra.mxu0 0.0
    %232 = vmatprep.subr.mxu0 0.0
    %233 = vmatpush1.msra.mxu0 0.0
    %234 = vmatprep.subr.mxu0 0.0
    %235 = vmatpush1.msra.mxu0 0.0
    %236 = vmatprep.subr.mxu0 0.0
    %237 = vmatpush1.msra.mxu0 0.0
    %238 = vmatprep.subr.mxu0 0.0
    %239 = vmatpush1.msra.mxu0 0.0
    %240 = vmatprep.subr.mxu0 0.0
    %241 = vmatpush1.msra.mxu0 0.0
    %242 = vmatprep.subr.mxu0 0.0
    %243 = vmatpush1.msra.mxu0 0.0
    %244 = vmatprep.subr.mxu0 0.0
    %245 = vmatpush1.msra.mxu0 0.0
    %246 = vmatprep.subr.mxu0 0.0
    %247 = vmatpush1.msra.mxu0 0.0
    %248 = vmatprep.subr.mxu0 0.0
    %249 = vmatpush1.msra.mxu0 0.0
    %250 = vmatprep.mubr.f32.mxu0 0.0
    %251 = vmatmul.mubr.f32.gmra.mrb[0].mxu0 %v139
    %v252 = vpop.f32.mrb[0].mxu0
    %v253 = vadd.f32 0.0, %v252
    %v254 = vpop.f32.mrb[0].mxu0
    %255 = vmatprep.mubr.f32.mxu0 0.0
    %256 = vmatmul.mubr.f32.gmra.mrb[0].mxu0 %v142
    %v257 = vpop.f32.mrb[0].mxu0
    %v258 = vadd.f32 0.0, %v257
    %v259 = vpop.f32.mrb[0].mxu0
    %260 = vmatprep.mubr.f32.mxu0 0.0
    %261 = vmatmul.mubr.f32.gmra.mrb[0].mxu0 %v145
    %v262 = vpop.f32.mrb[0].mxu0
    %v263 = vadd.f32 0.0, %v262
    %v264 = vpop.f32.mrb[0].mxu0
    %265 = vmatprep.mubr.f32.mxu0 0.0
    %266 = vmatmul.mubr.f32.gmra.mrb[0].mxu0 %v148
    %v267 = vpop.f32.mrb[0].mxu0
    %v268 = vadd.f32 0.0, %v267
    %v269 = vpop.f32.mrb[0].mxu0
    %270 = vmatprep.mubr.f32.mxu0 0.0
    %271 = vmatmul.mubr.f32.gmra.mrb[0].mxu0 %v151
    %v272 = vpop.f32.mrb[0].mxu0
    %v273 = vadd.f32 0.0, %v272
    %v274 = vpop.f32.mrb[0].mxu0
    %275 = vmatprep.mubr.f32.mxu0 0.0
    %276 = vmatmul.mubr.f32.gmra.mrb[0].mxu0 %v154
    %v277 = vpop.f32.mrb[0].mxu0
    %v278 = vadd.f32 0.0, %v277
    %v279 = vpop.f32.mrb[0].mxu0
    %280 = vmatprep.mubr.f32.mxu0 0.0
    %281 = vmatmul.mubr.f32.gmra.mrb[0].mxu0 %v157
    %v282 = vpop.f32.mrb[0].mxu0
    %v283 = vadd.f32 0.0, %v282
    %v284 = vpop.f32.mrb[0].mxu0
    %285 = vmatprep.mubr.f32.mxu0 0.0
    %286 = vmatmul.mubr.f32.gmra.mrb[0].mxu0 %v160
    %v287 = vpop.f32.mrb[0].mxu0
    %v288 = vadd.f32 0.0, %v287
    %v289 = vpop.f32.mrb[0].mxu0
    %290 = vmatprep.mubr.f32.mxu0 0.0
    %291 = vmatmul.mubr.f32.gmra.mrb[0].mxu0 %v163
    %v292 = vpop.f32.mrb[0].mxu0
    %v293 = vadd.f32 0.0, %v292
    %v294 = vpop.f32.mrb[0].mxu0
    %295 = vmatprep.mubr.f32.mxu0 0.0
    %296 = vmatmul.mubr.f32.gmra.mrb[0].mxu0 %v166
    %v297 = vpop.f32.mrb[0].mxu0
    %v298 = vadd.f32 0.0, %v297
    %v299 = vpop.f32.mrb[0].mxu0
    %300 = vmatprep.mubr.f32.mxu0 0.0
    %301 = vmatmul.mubr.f32.gmra.mrb[0].mxu0 %v169
    %v302 = vpop.f32.mrb[0].mxu0
    %v303 = vadd.f32 0.0, %v302
    %v304 = vpop.f32.mrb[0].mxu0
    %305 = vmatprep.mubr.f32.mxu0 0.0
    %306 = vmatmul.mubr.f32.gmra.mrb[0].mxu0 %v172
    %v307 = vpop.f32.mrb[0].mxu0
    %v308 = vadd.f32 0.0, %v307
    %v309 = vpop.f32.mrb[0].mxu0
    %310 = vmatprep.mubr.f32.mxu0 0.0
    %311 = vmatmul.mubr.f32.gmra.mrb[0].mxu0 %v175
    %v312 = vpop.f32.mrb[0].mxu0
    %v313 = vadd.f32 0.0, %v312
    %v314 = vpop.f32.mrb[0].mxu0
    %315 = vmatprep.mubr.f32.mxu0 0.0
    %316 = vmatmul.mubr.f32.gmra.mrb[0].mxu0 %v178
    %v317 = vpop.f32.mrb[0].mxu0
    %v318 = vadd.f32 0.0, %v317
    %v319 = vpop.f32.mrb[0].mxu0
    %320 = vmatprep.mubr.f32.mxu0 0.0
    %321 = vmatmul.mubr.f32.gmra.mrb[0].mxu0 %v181
    %v322 = vpop.f32.mrb[0].mxu0
    %v323 = vadd.f32 0.0, %v322
    %v324 = vpop.f32.mrb[0].mxu0
    %325 = vmatprep.mubr.f32.mxu0 0.0
    %326 = vmatmul.mubr.f32.gmra.mrb[0].mxu0 %v184
    %v327 = vpop.f32.mrb[0].mxu0
    %v328 = vadd.f32 0.0, %v327
    %v329 = vpop.f32.mrb[0].mxu0
    %330 = vdwg.mxu0
    %v332 = vsel %vm137, %v101, 0
    %v335 = vsel %vm137, %v102, 0
    %v338 = vsel %vm137, %v103, 0
    %v341 = vsel %vm137, %v104, 0
    %v344 = vsel %vm137, %v105, 0
    %v347 = vsel %vm137, %v106, 0
    %v350 = vsel %vm137, %v107, 0
    %v353 = vsel %vm137, %v108, 0
    %v356 = vsel %vm137, %v109, 0
    %v359 = vsel %vm137, %v110, 0
    %v362 = vsel %vm137, %v111, 0
    %v365 = vsel %vm137, %v112, 0
    %v368 = vsel %vm137, %v113, 0
    %v371 = vsel %vm137, %v114, 0
    %v374 = vsel %vm137, %v115, 0
    %v377 = vsel %vm137, %v116, 0
    %379 = vmatprep.subr.mxu0 0.0
    %380 = vmatpush1.msra.mxu0 %v117
    %381 = vmatprep.subr.mxu0 0.0
    %382 = vmatpush1.msra.mxu0 %v118
    %383 = vmatprep.subr.mxu0 0.0
    %384 = vmatpush1.msra.mxu0 0.0
    %385 = vmatprep.subr.mxu0 0.0
    %386 = vmatpush1.msra.mxu0 0.0
    %387 = vmatprep.subr.mxu0 0.0
    %388 = vmatpush1.msra.mxu0 0.0
    %389 = vmatprep.subr.mxu0 0.0
    %390 = vmatpush1.msra.mxu0 0.0
    %391 = vmatprep.subr.mxu0 0.0
    %392 = vmatpush1.msra.mxu0 0.0
    %393 = vmatprep.subr.mxu0 0.0
    %394 = vmatpush1.msra.mxu0 0.0
    %395 = vmatprep.subr.mxu0 0.0
    %396 = vmatpush1.msra.mxu0 0.0
    %397 = vmatprep.subr.mxu0 0.0
    %398 = vmatpush1.msra.mxu0 0.0
    %399 = vmatprep.subr.mxu0 0.0
    %400 = vmatpush1.msra.mxu0 0.0
    %401 = vmatprep.subr.mxu0 0.0
    %402 = vmatpush1.msra.mxu0 0.0
    %403 = vmatprep.subr.mxu0 0.0
    %404 = vmatpush1.msra.mxu0 0.0
    %405 = vmatprep.subr.mxu0 0.0
    %406 = vmatpush1.msra.mxu0 0.0
    %407 = vmatprep.subr.mxu0 0.0
    %408 = vmatpush1.msra.mxu0 0.0
    %409 = vmatprep.subr.mxu0 0.0
    %410 = vmatpush1.msra.mxu0 0.0
    %411 = vmatprep.subr.mxu0 0.0
    %412 = vmatpush1.msra.mxu0 0.0
    %413 = vmatprep.subr.mxu0 0.0
    %414 = vmatpush1.msra.mxu0 0.0
    %415 = vmatprep.subr.mxu0 0.0
    %416 = vmatpush1.msra.mxu0 0.0
    %417 = vmatprep.subr.mxu0 0.0
    %418 = vmatpush1.msra.mxu0 0.0
    %419 = vmatprep.subr.mxu0 0.0
    %420 = vmatpush1.msra.mxu0 0.0
    %421 = vmatprep.subr.mxu0 0.0
    %422 = vmatpush1.msra.mxu0 0.0
    %423 = vmatprep.subr.mxu0 0.0
    %424 = vmatpush1.msra.mxu0 0.0
    %425 = vmatprep.subr.mxu0 0.0
    %426 = vmatpush1.msra.mxu0 0.0
    %427 = vmatprep.subr.mxu0 0.0
    %428 = vmatpush1.msra.mxu0 0.0
    %429 = vmatprep.subr.mxu0 0.0
    %430 = vmatpush1.msra.mxu0 0.0
    %431 = vmatprep.subr.mxu0 0.0
    %432 = vmatpush1.msra.mxu0 0.0
    %433 = vmatprep.subr.mxu0 0.0
    %434 = vmatpush1.msra.mxu0 0.0
    %435 = vmatprep.subr.mxu0 0.0
    %436 = vmatpush1.msra.mxu0 0.0
    %437 = vmatprep.subr.mxu0 0.0
    %438 = vmatpush1.msra.mxu0 0.0
    %439 = vmatprep.subr.mxu0 0.0
    %440 = vmatpush1.msra.mxu0 0.0
    %441 = vmatprep.subr.mxu0 0.0
    %442 = vmatpush1.msra.mxu0 0.0
    %443 = vmatprep.mubr.f32.mxu0 0.0
    %444 = vmatmul.mubr.f32.gmra.mrb[0].mxu0 %v332
    %v445 = vpop.f32.mrb[0].mxu0
    %v446 = vadd.f32 %v253, %v445
    %v447 = vpop.f32.mrb[0].mxu0
    %448 = vmatprep.mubr.f32.mxu0 0.0
    %449 = vmatmul.mubr.f32.gmra.mrb[0].mxu0 %v335
    %v450 = vpop.f32.mrb[0].mxu0
    %v451 = vadd.f32 %v258, %v450
    %v452 = vpop.f32.mrb[0].mxu0
    %453 = vmatprep.mubr.f32.mxu0 0.0
    %454 = vmatmul.mubr.f32.gmra.mrb[0].mxu0 %v338
    %v455 = vpop.f32.mrb[0].mxu0
    %v456 = vadd.f32 %v263, %v455
    %v457 = vpop.f32.mrb[0].mxu0
    %458 = vmatprep.mubr.f32.mxu0 0.0
    %459 = vmatmul.mubr.f32.gmra.mrb[0].mxu0 %v341
    %v460 = vpop.f32.mrb[0].mxu0
    %v461 = vadd.f32 %v268, %v460
    %v462 = vpop.f32.mrb[0].mxu0
    %463 = vmatprep.mubr.f32.mxu0 0.0
    %464 = vmatmul.mubr.f32.gmra.mrb[0].mxu0 %v344
    %v465 = vpop.f32.mrb[0].mxu0
    %v466 = vadd.f32 %v273, %v465
    %v467 = vpop.f32.mrb[0].mxu0
    %468 = vmatprep.mubr.f32.mxu0 0.0
    %469 = vmatmul.mubr.f32.gmra.mrb[0].mxu0 %v347
    %v470 = vpop.f32.mrb[0].mxu0
    %v471 = vadd.f32 %v278, %v470
    %v472 = vpop.f32.mrb[0].mxu0
    %473 = vmatprep.mubr.f32.mxu0 0.0
    %474 = vmatmul.mubr.f32.gmra.mrb[0].mxu0 %v350
    %v475 = vpop.f32.mrb[0].mxu0
    %v476 = vadd.f32 %v283, %v475
    %v477 = vpop.f32.mrb[0].mxu0
    %478 = vmatprep.mubr.f32.mxu0 0.0
    %479 = vmatmul.mubr.f32.gmra.mrb[0].mxu0 %v353
    %v480 = vpop.f32.mrb[0].mxu0
    %v481 = vadd.f32 %v288, %v480
    %v482 = vpop.f32.mrb[0].mxu0
    %483 = vmatprep.mubr.f32.mxu0 0.0
    %484 = vmatmul.mubr.f32.gmra.mrb[0].mxu0 %v356
    %v485 = vpop.f32.mrb[0].mxu0
    %v486 = vadd.f32 %v293, %v485
    %v487 = vpop.f32.mrb[0].mxu0
    %488 = vmatprep.mubr.f32.mxu0 0.0
    %489 = vmatmul.mubr.f32.gmra.mrb[0].mxu0 %v359
    %v490 = vpop.f32.mrb[0].mxu0
    %v491 = vadd.f32 %v298, %v490
    %v492 = vpop.f32.mrb[0].mxu0
    %493 = vmatprep.mubr.f32.mxu0 0.0
    %494 = vmatmul.mubr.f32.gmra.mrb[0].mxu0 %v362
    %v495 = vpop.f32.mrb[0].mxu0
    %v496 = vadd.f32 %v303, %v495
    %v497 = vpop.f32.mrb[0].mxu0
    %498 = vmatprep.mubr.f32.mxu0 0.0
    %499 = vmatmul.mubr.f32.gmra.mrb[0].mxu0 %v365
    %v500 = vpop.f32.mrb[0].mxu0
    %v501 = vadd.f32 %v308, %v500
    %v502 = vpop.f32.mrb[0].mxu0
    %503 = vmatprep.mubr.f32.mxu0 0.0
    %504 = vmatmul.mubr.f32.gmra.mrb[0].mxu0 %v368
    %v505 = vpop.f32.mrb[0].mxu0
    %v506 = vadd.f32 %v313, %v505
    %v507 = vpop.f32.mrb[0].mxu0
    %508 = vmatprep.mubr.f32.mxu0 0.0
    %509 = vmatmul.mubr.f32.gmra.mrb[0].mxu0 %v371
    %v510 = vpop.f32.mrb[0].mxu0
    %v511 = vadd.f32 %v318, %v510
    %v512 = vpop.f32.mrb[0].mxu0
    %513 = vmatprep.mubr.f32.mxu0 0.0
    %514 = vmatmul.mubr.f32.gmra.mrb[0].mxu0 %v374
    %v515 = vpop.f32.mrb[0].mxu0
    %v516 = vadd.f32 %v323, %v515
    %v517 = vpop.f32.mrb[0].mxu0
    %518 = vmatprep.mubr.f32.mxu0 0.0
    %519 = vmatmul.mubr.f32.gmra.mrb[0].mxu0 %v377
    %v520 = vpop.f32.mrb[0].mxu0
    %v521 = vadd.f32 %v328, %v520
    %v522 = vpop.f32.mrb[0].mxu0
    %523 = vdwg.mxu0
    %v524 = vld [vmem:[%s6] sm:$0x1]
    %v526 = vlaneseq
    %v527 = vshrl.u32 %v526, 7
    %v528 = vsub.s32 0, %v527
    %v529 = vrot.slane %v524, %v528
    %v531 = vadd.f32 %v446, %v529
    %v532 = vadd.f32 %v451, %v529
    %v533 = vadd.f32 %v456, %v529
    %v534 = vadd.f32 %v461, %v529
    %v535 = vadd.f32 %v466, %v529
    %v536 = vadd.f32 %v471, %v529
    %v537 = vadd.f32 %v476, %v529
    %v538 = vadd.f32 %v481, %v529
    %v539 = vadd.f32 %v486, %v529
    %v540 = vadd.f32 %v491, %v529
    %v541 = vadd.f32 %v496, %v529
    %v542 = vadd.f32 %v501, %v529
    %v543 = vadd.f32 %v506, %v529
    %v544 = vadd.f32 %v511, %v529
    %v545 = vadd.f32 %v516, %v529
    %v546 = vadd.f32 %v521, %v529
    %v547 = vmax.f32 %v531, 0.0
    %v548 = vmax.f32 %v532, 0.0
    %v549 = vmax.f32 %v533, 0.0
    %v550 = vmax.f32 %v534, 0.0
    %v551 = vmax.f32 %v535, 0.0
    %v552 = vmax.f32 %v536, 0.0
    %v553 = vmax.f32 %v537, 0.0
    %v554 = vmax.f32 %v538, 0.0
    %v555 = vmax.f32 %v539, 0.0
    %v556 = vmax.f32 %v540, 0.0
    %v557 = vmax.f32 %v541, 0.0
    %v558 = vmax.f32 %v542, 0.0
    %v559 = vmax.f32 %v543, 0.0
    %v560 = vmax.f32 %v544, 0.0
    %v561 = vmax.f32 %v545, 0.0
    %v562 = vmax.f32 %v546, 0.0
    %v563 = vld [vmem:[%s7] sm:$0xff]
    %v564 = vld [vmem:[%s7 + $0x8] sm:$0xff]
    %v565 = vld [vmem:[%s7 + $0x10] sm:$0xff]
    %v566 = vld [vmem:[%s7 + $0x18] sm:$0xff]
    %v567 = vld [vmem:[%s8] sm:$0x1]
    %v569 = vlaneseq
    %v570 = vshrl.u32 %v569, 7
    %v571 = vsub.s32 0, %v570
    %v572 = vrot.slane %v567, %v571
    %vm574 = vcmask 261120
    %v576 = vsel %vm574, %v547, 0
    %v579 = vsel %vm574, %v548, 0
    %v582 = vsel %vm574, %v549, 0
    %v585 = vsel %vm574, %v550, 0
    %v588 = vsel %vm574, %v551, 0
    %v591 = vsel %vm574, %v552, 0
    %v594 = vsel %vm574, %v553, 0
    %v597 = vsel %vm574, %v554, 0
    %v600 = vsel %vm574, %v555, 0
    %v603 = vsel %vm574, %v556, 0
    %v606 = vsel %vm574, %v557, 0
    %v609 = vsel %vm574, %v558, 0
    %v612 = vsel %vm574, %v559, 0
    %v615 = vsel %vm574, %v560, 0
    %v618 = vsel %vm574, %v561, 0
    %v621 = vsel %vm574, %v562, 0
    %623 = vmatprep.subr.mxu0 0.0
    %624 = vmatpush1.msra.mxu0 %v563
    %625 = vmatprep.subr.mxu0 0.0
    %626 = vmatpush1.msra.mxu0 %v564
    %627 = vmatprep.subr.mxu0 0.0
    %628 = vmatpush1.msra.mxu0 %v565
    %629 = vmatprep.subr.mxu0 0.0
    %630 = vmatpush1.msra.mxu0 %v566
    %631 = vmatprep.subr.mxu0 0.0
    %632 = vmatpush1.msra.mxu0 0.0
    %633 = vmatprep.subr.mxu0 0.0
    %634 = vmatpush1.msra.mxu0 0.0
    %635 = vmatprep.subr.mxu0 0.0
    %636 = vmatpush1.msra.mxu0 0.0
    %637 = vmatprep.subr.mxu0 0.0
    %638 = vmatpush1.msra.mxu0 0.0
    %639 = vmatprep.subr.mxu0 0.0
    %640 = vmatpush1.msra.mxu0 0.0
    %641 = vmatprep.subr.mxu0 0.0
    %642 = vmatpush1.msra.mxu0 0.0
    %643 = vmatprep.subr.mxu0 0.0
    %644 = vmatpush1.msra.mxu0 0.0
    %645 = vmatprep.subr.mxu0 0.0
    %646 = vmatpush1.msra.mxu0 0.0
    %647 = vmatprep.subr.mxu0 0.0
    %648 = vmatpush1.msra.mxu0 0.0
    %649 = vmatprep.subr.mxu0 0.0
    %650 = vmatpush1.msra.mxu0 0.0
    %651 = vmatprep.subr.mxu0 0.0
    %652 = vmatpush1.msra.mxu0 0.0
    %653 = vmatprep.subr.mxu0 0.0
    %654 = vmatpush1.msra.mxu0 0.0
    %655 = vmatprep.subr.mxu0 0.0
    %656 = vmatpush1.msra.mxu0 0.0
    %657 = vmatprep.subr.mxu0 0.0
    %658 = vmatpush1.msra.mxu0 0.0
    %659 = vmatprep.subr.mxu0 0.0
    %660 = vmatpush1.msra.mxu0 0.0
    %661 = vmatprep.subr.mxu0 0.0
    %662 = vmatpush1.msra.mxu0 0.0
    %663 = vmatprep.subr.mxu0 0.0
    %664 = vmatpush1.msra.mxu0 0.0
    %665 = vmatprep.subr.mxu0 0.0
    %666 = vmatpush1.msra.mxu0 0.0
    %667 = vmatprep.subr.mxu0 0.0
    %668 = vmatpush1.msra.mxu0 0.0
    %669 = vmatprep.subr.mxu0 0.0
    %670 = vmatpush1.msra.mxu0 0.0
    %671 = vmatprep.subr.mxu0 0.0
    %672 = vmatpush1.msra.mxu0 0.0
    %673 = vmatprep.subr.mxu0 0.0
    %674 = vmatpush1.msra.mxu0 0.0
    %675 = vmatprep.subr.mxu0 0.0
    %676 = vmatpush1.msra.mxu0 0.0
    %677 = vmatprep.subr.mxu0 0.0
    %678 = vmatpush1.msra.mxu0 0.0
    %679 = vmatprep.subr.mxu0 0.0
    %680 = vmatpush1.msra.mxu0 0.0
    %681 = vmatprep.subr.mxu0 0.0
    %682 = vmatpush1.msra.mxu0 0.0
    %683 = vmatprep.subr.mxu0 0.0
    %684 = vmatpush1.msra.mxu0 0.0
    %685 = vmatprep.subr.mxu0 0.0
    %686 = vmatpush1.msra.mxu0 0.0
    %687 = vmatprep.mubr.f32.mxu0 0.0
    %688 = vmatmul.mubr.f32.gmra.mrb[0].mxu0 %v576
    %v689 = vpop.f32.mrb[0].mxu0
    %v690 = vadd.f32 %v572, %v689
    %v691 = vpop.f32.mrb[0].mxu0
    %692 = vmatprep.mubr.f32.mxu0 0.0
    %693 = vmatmul.mubr.f32.gmra.mrb[0].mxu0 %v579
    %v694 = vpop.f32.mrb[0].mxu0
    %v695 = vadd.f32 %v572, %v694
    %v696 = vpop.f32.mrb[0].mxu0
    %697 = vmatprep.mubr.f32.mxu0 0.0
    %698 = vmatmul.mubr.f32.gmra.mrb[0].mxu0 %v582
    %v699 = vpop.f32.mrb[0].mxu0
    %v700 = vadd.f32 %v572, %v699
    %v701 = vpop.f32.mrb[0].mxu0
    %702 = vmatprep.mubr.f32.mxu0 0.0
    %703 = vmatmul.mubr.f32.gmra.mrb[0].mxu0 %v585
    %v704 = vpop.f32.mrb[0].mxu0
    %v705 = vadd.f32 %v572, %v704
    %v706 = vpop.f32.mrb[0].mxu0
    %707 = vmatprep.mubr.f32.mxu0 0.0
    %708 = vmatmul.mubr.f32.gmra.mrb[0].mxu0 %v588
    %v709 = vpop.f32.mrb[0].mxu0
    %v710 = vadd.f32 %v572, %v709
    %v711 = vpop.f32.mrb[0].mxu0
    %712 = vmatprep.mubr.f32.mxu0 0.0
    %713 = vmatmul.mubr.f32.gmra.mrb[0].mxu0 %v591
    %v714 = vpop.f32.mrb[0].mxu0
    %v715 = vadd.f32 %v572, %v714
    %v716 = vpop.f32.mrb[0].mxu0
    %717 = vmatprep.mubr.f32.mxu0 0.0
    %718 = vmatmul.mubr.f32.gmra.mrb[0].mxu0 %v594
    %v719 = vpop.f32.mrb[0].mxu0
    %v720 = vadd.f32 %v572, %v719
    %v721 = vpop.f32.mrb[0].mxu0
    %722 = vmatprep.mubr.f32.mxu0 0.0
    %723 = vmatmul.mubr.f32.gmra.mrb[0].mxu0 %v597
    %v724 = vpop.f32.mrb[0].mxu0
    %v725 = vadd.f32 %v572, %v724
    %v726 = vpop.f32.mrb[0].mxu0
    %727 = vmatprep.mubr.f32.mxu0 0.0
    %728 = vmatmul.mubr.f32.gmra.mrb[0].mxu0 %v600
    %v729 = vpop.f32.mrb[0].mxu0
    %v730 = vadd.f32 %v572, %v729
    %v731 = vpop.f32.mrb[0].mxu0
    %732 = vmatprep.mubr.f32.mxu0 0.0
    %733 = vmatmul.mubr.f32.gmra.mrb[0].mxu0 %v603
    %v734 = vpop.f32.mrb[0].mxu0
    %v735 = vadd.f32 %v572, %v734
    %v736 = vpop.f32.mrb[0].mxu0
    %737 = vmatprep.mubr.f32.mxu0 0.0
    %738 = vmatmul.mubr.f32.gmra.mrb[0].mxu0 %v606
    %v739 = vpop.f32.mrb[0].mxu0
    %v740 = vadd.f32 %v572, %v739
    %v741 = vpop.f32.mrb[0].mxu0
    %742 = vmatprep.mubr.f32.mxu0 0.0
    %743 = vmatmul.mubr.f32.gmra.mrb[0].mxu0 %v609
    %v744 = vpop.f32.mrb[0].mxu0
    %v745 = vadd.f32 %v572, %v744
    %v746 = vpop.f32.mrb[0].mxu0
    %747 = vmatprep.mubr.f32.mxu0 0.0
    %748 = vmatmul.mubr.f32.gmra.mrb[0].mxu0 %v612
    %v749 = vpop.f32.mrb[0].mxu0
    %v750 = vadd.f32 %v572, %v749
    %v751 = vpop.f32.mrb[0].mxu0
    %752 = vmatprep.mubr.f32.mxu0 0.0
    %753 = vmatmul.mubr.f32.gmra.mrb[0].mxu0 %v615
    %v754 = vpop.f32.mrb[0].mxu0
    %v755 = vadd.f32 %v572, %v754
    %v756 = vpop.f32.mrb[0].mxu0
    %757 = vmatprep.mubr.f32.mxu0 0.0
    %758 = vmatmul.mubr.f32.gmra.mrb[0].mxu0 %v618
    %v759 = vpop.f32.mrb[0].mxu0
    %v760 = vadd.f32 %v572, %v759
    %v761 = vpop.f32.mrb[0].mxu0
    %762 = vmatprep.mubr.f32.mxu0 0.0
    %763 = vmatmul.mubr.f32.gmra.mrb[0].mxu0 %v621
    %v764 = vpop.f32.mrb[0].mxu0
    %v765 = vadd.f32 %v572, %v764
    %v766 = vpop.f32.mrb[0].mxu0
    %767 = vdwg.mxu0
    %v768 = vmax.f32 %v690, 0.0
    %v769 = vmax.f32 %v695, 0.0
    %v770 = vmax.f32 %v700, 0.0
    %v771 = vmax.f32 %v705, 0.0
    %v772 = vmax.f32 %v710, 0.0
    %v773 = vmax.f32 %v715, 0.0
    %v774 = vmax.f32 %v720, 0.0
    %v775 = vmax.f32 %v725, 0.0
    %v776 = vmax.f32 %v730, 0.0
    %v777 = vmax.f32 %v735, 0.0
    %v778 = vmax.f32 %v740, 0.0
    %v779 = vmax.f32 %v745, 0.0
    %v780 = vmax.f32 %v750, 0.0
    %v781 = vmax.f32 %v755, 0.0
    %v782 = vmax.f32 %v760, 0.0
    %v783 = vmax.f32 %v765, 0.0
    %v784 = vld [vmem:[%s9] sm:$0x1]
    %v785 = vld [vmem:[%s10] sm:$0x1]
    %v787 = vsel %vm137, %v785, 0
    %v790 = vsel %vm137, %v768, 0
    %v793 = vsel %vm137, %v769, 0
    %v796 = vsel %vm137, %v770, 0
    %v799 = vsel %vm137, %v771, 0
    %v802 = vsel %vm137, %v772, 0
    %v805 = vsel %vm137, %v773, 0
    %v808 = vsel %vm137, %v774, 0
    %v811 = vsel %vm137, %v775, 0
    %v814 = vsel %vm137, %v776, 0
    %v817 = vsel %vm137, %v777, 0
    %v820 = vsel %vm137, %v778, 0
    %v823 = vsel %vm137, %v779, 0
    %v826 = vsel %vm137, %v780, 0
    %v829 = vsel %vm137, %v781, 0
    %v832 = vsel %vm137, %v782, 0
    %v835 = vsel %vm137, %v783, 0
    %837 = vmatprep.subr.mxu0 0.0
    %838 = vmatpush1.xpose.msra.mxu0 %v790
    %839 = vmatprep.subr.mxu0 0.0
    %840 = vmatpush1.xpose.msra.mxu0 %v793
    %841 = vmatprep.subr.mxu0 0.0
    %842 = vmatpush1.xpose.msra.mxu0 %v796
    %843 = vmatprep.subr.mxu0 0.0
    %844 = vmatpush1.xpose.msra.mxu0 %v799
    %845 = vmatprep.subr.mxu0 0.0
    %846 = vmatpush1.xpose.msra.mxu0 %v802
    %847 = vmatprep.subr.mxu0 0.0
    %848 = vmatpush1.xpose.msra.mxu0 %v805
    %849 = vmatprep.subr.mxu0 0.0
    %850 = vmatpush1.xpose.msra.mxu0 %v808
    %851 = vmatprep.subr.mxu0 0.0
    %852 = vmatpush1.xpose.msra.mxu0 %v811
    %853 = vmatprep.subr.mxu0 0.0
    %854 = vmatpush1.xpose.msra.mxu0 %v814
    %855 = vmatprep.subr.mxu0 0.0
    %856 = vmatpush1.xpose.msra.mxu0 %v817
    %857 = vmatprep.subr.mxu0 0.0
    %858 = vmatpush1.xpose.msra.mxu0 %v820
    %859 = vmatprep.subr.mxu0 0.0
    %860 = vmatpush1.xpose.msra.mxu0 %v823
    %861 = vmatprep.subr.mxu0 0.0
    %862 = vmatpush1.xpose.msra.mxu0 %v826
    %863 = vmatprep.subr.mxu0 0.0
    %864 = vmatpush1.xpose.msra.mxu0 %v829
    %865 = vmatprep.subr.mxu0 0.0
    %866 = vmatpush1.xpose.msra.mxu0 %v832
    %867 = vmatprep.subr.mxu0 0.0
    %868 = vmatpush1.xpose.msra.mxu0 %v835
    %869 = vmatprep.subr.mxu0 0.0
    %870 = vmatpush1.xpose.msra.mxu0 0.0
    %871 = vmatprep.subr.mxu0 0.0
    %872 = vmatpush1.xpose.msra.mxu0 0.0
    %873 = vmatprep.subr.mxu0 0.0
    %874 = vmatpush1.xpose.msra.mxu0 0.0
    %875 = vmatprep.subr.mxu0 0.0
    %876 = vmatpush1.xpose.msra.mxu0 0.0
    %877 = vmatprep.subr.mxu0 0.0
    %878 = vmatpush1.xpose.msra.mxu0 0.0
    %879 = vmatprep.subr.mxu0 0.0
    %880 = vmatpush1.xpose.msra.mxu0 0.0
    %881 = vmatprep.subr.mxu0 0.0
    %882 = vmatpush1.xpose.msra.mxu0 0.0
    %883 = vmatprep.subr.mxu0 0.0
    %884 = vmatpush1.xpose.msra.mxu0 0.0
    %885 = vmatprep.subr.mxu0 0.0
    %886 = vmatpush1.xpose.msra.mxu0 0.0
    %887 = vmatprep.subr.mxu0 0.0
    %888 = vmatpush1.xpose.msra.mxu0 0.0
    %889 = vmatprep.subr.mxu0 0.0
    %890 = vmatpush1.xpose.msra.mxu0 0.0
    %891 = vmatprep.subr.mxu0 0.0
    %892 = vmatpush1.xpose.msra.mxu0 0.0
    %893 = vmatprep.subr.mxu0 0.0
    %894 = vmatpush1.xpose.msra.mxu0 0.0
    %895 = vmatprep.subr.mxu0 0.0
    %896 = vmatpush1.xpose.msra.mxu0 0.0
    %897 = vmatprep.subr.mxu0 0.0
    %898 = vmatpush1.xpose.msra.mxu0 0.0
    %899 = vmatprep.subr.mxu0 0.0
    %900 = vmatpush1.xpose.msra.mxu0 0.0
    %901 = vmatprep.mubr.f32.mxu0 0.0
    %902 = vmatmul.mubr.f32.gmra.mrb[0].mxu0 %v787
    %v903 = vpop.f32.mrb[0].mxu0
    %v904 = vadd.f32 0.0, %v903
    %v905 = vpop.f32.mrb[0].mxu0
    %906 = vdwg.mxu0
    %v908 = vsel %vm137, %v784, 0
    %v911 = vsel %vm137, %v85, 0
    %v914 = vsel %vm137, %v86, 0
    %v917 = vsel %vm137, %v87, 0
    %v920 = vsel %vm137, %v88, 0
    %v923 = vsel %vm137, %v89, 0
    %v926 = vsel %vm137, %v90, 0
    %v929 = vsel %vm137, %v91, 0
    %v932 = vsel %vm137, %v92, 0
    %v935 = vsel %vm137, %v93, 0
    %v938 = vsel %vm137, %v94, 0
    %v941 = vsel %vm137, %v95, 0
    %v944 = vsel %vm137, %v96, 0
    %v947 = vsel %vm137, %v97, 0
    %v950 = vsel %vm137, %v98, 0
    %v953 = vsel %vm137, %v99, 0
    %v956 = vsel %vm137, %v100, 0
    %958 = vmatprep.subr.mxu0 0.0
    %959 = vmatpush1.xpose.msra.mxu0 %v911
    %960 = vmatprep.subr.mxu0 0.0
    %961 = vmatpush1.xpose.msra.mxu0 %v914
    %962 = vmatprep.subr.mxu0 0.0
    %963 = vmatpush1.xpose.msra.mxu0 %v917
    %964 = vmatprep.subr.mxu0 0.0
    %965 = vmatpush1.xpose.msra.mxu0 %v920
    %966 = vmatprep.subr.mxu0 0.0
    %967 = vmatpush1.xpose.msra.mxu0 %v923
    %968 = vmatprep.subr.mxu0 0.0
    %969 = vmatpush1.xpose.msra.mxu0 %v926
    %970 = vmatprep.subr.mxu0 0.0
    %971 = vmatpush1.xpose.msra.mxu0 %v929
    %972 = vmatprep.subr.mxu0 0.0
    %973 = vmatpush1.xpose.msra.mxu0 %v932
    %974 = vmatprep.subr.mxu0 0.0
    %975 = vmatpush1.xpose.msra.mxu0 %v935
    %976 = vmatprep.subr.mxu0 0.0
    %977 = vmatpush1.xpose.msra.mxu0 %v938
    %978 = vmatprep.subr.mxu0 0.0
    %979 = vmatpush1.xpose.msra.mxu0 %v941
    %980 = vmatprep.subr.mxu0 0.0
    %981 = vmatpush1.xpose.msra.mxu0 %v944
    %982 = vmatprep.subr.mxu0 0.0
    %983 = vmatpush1.xpose.msra.mxu0 %v947
    %984 = vmatprep.subr.mxu0 0.0
    %985 = vmatpush1.xpose.msra.mxu0 %v950
    %986 = vmatprep.subr.mxu0 0.0
    %987 = vmatpush1.xpose.msra.mxu0 %v953
    %988 = vmatprep.subr.mxu0 0.0
    %989 = vmatpush1.xpose.msra.mxu0 %v956
    %990 = vmatprep.subr.mxu0 0.0
    %991 = vmatpush1.xpose.msra.mxu0 0.0
    %992 = vmatprep.subr.mxu0 0.0
    %993 = vmatpush1.xpose.msra.mxu0 0.0
    %994 = vmatprep.subr.mxu0 0.0
    %995 = vmatpush1.xpose.msra.mxu0 0.0
    %996 = vmatprep.subr.mxu0 0.0
    %997 = vmatpush1.xpose.msra.mxu0 0.0
    %998 = vmatprep.subr.mxu0 0.0
    %999 = vmatpush1.xpose.msra.mxu0 0.0
    %1000 = vmatprep.subr.mxu0 0.0
    %1001 = vmatpush1.xpose.msra.mxu0 0.0
    %1002 = vmatprep.subr.mxu0 0.0
    %1003 = vmatpush1.xpose.msra.mxu0 0.0
    %1004 = vmatprep.subr.mxu0 0.0
    %1005 = vmatpush1.xpose.msra.mxu0 0.0
    %1006 = vmatprep.subr.mxu0 0.0
    %1007 = vmatpush1.xpose.msra.mxu0 0.0
    %1008 = vmatprep.subr.mxu0 0.0
    %1009 = vmatpush1.xpose.msra.mxu0 0.0
    %1010 = vmatprep.subr.mxu0 0.0
    %1011 = vmatpush1.xpose.msra.mxu0 0.0
    %1012 = vmatprep.subr.mxu0 0.0
    %1013 = vmatpush1.xpose.msra.mxu0 0.0
    %1014 = vmatprep.subr.mxu0 0.0
    %1015 = vmatpush1.xpose.msra.mxu0 0.0
    %1016 = vmatprep.subr.mxu0 0.0
    %1017 = vmatpush1.xpose.msra.mxu0 0.0
    %1018 = vmatprep.subr.mxu0 0.0
    %1019 = vmatpush1.xpose.msra.mxu0 0.0
    %1020 = vmatprep.subr.mxu0 0.0
    %1021 = vmatpush1.xpose.msra.mxu0 0.0
    %1022 = vmatprep.mubr.f32.mxu0 0.0
    %1023 = vmatmul.mubr.f32.gmra.mrb[0].mxu0 %v908
    %v1024 = vpop.f32.mrb[0].mxu0
    %v1025 = vadd.f32 %v904, %v1024
    %v1026 = vpop.f32.mrb[0].mxu0
    %1027 = vdwg.mxu0
    %1028 = vst [vmem:[#allocation5] sm:$0x1] %v1025
    // Predicated region
    $region50: #{tpu_custom_call.1} parent=1 // pred_check
      _
    $region51: #{tpu_custom_call.1} parent=1 // pred_check_branch
      %1030 = sbr.rel (0) target = $region53
    $region52: #{tpu_custom_call.1} parent=1 // pred_region
      %s1032 = ssub.s32 16, 16
      %1033 = vsyncadd [#allocation4], %s1032
      %s1035 = sshll.u32 [#allocation5], 4
      %s1036 = int_to_ptr.vmem [resolvable:$true] %s1035
      %1038 = dma.vmem_to_hbm [thread:$0]  %s1036, 16, %s11, [#allocation4]
    $region53: #{tpu_custom_call.1} parent=1 // pred_fallthru
      _
    // Predicated region
    $region54: #{tpu_custom_call.1} parent=1 // pred_check
      _
    $region55: #{tpu_custom_call.1} parent=1 // pred_check_branch
      %1040 = sbr.rel (0) target = $region57
    $region56: #{tpu_custom_call.1} parent=1 // pred_region
      %1041 = dma.done [#allocation4], 16
    $region57: #{tpu_custom_call.1} parent=1 // pred_fallthru
      _
    %1042 = vsyncpa [#allocation3], 1
    %1043 = vsyncpa [#allocation4], 1

</llo_original>
